<compile_context>
chip_gen: v7x
topology: tpu7x:2x2x1
jax: 0.10.0
libtpu: 0.0.40
codegen_flags: <defaults>
</compile_context>

<pallas_src>
import jax
import jax.numpy as jnp
from jax.experimental import pallas as pl
from jax.experimental.pallas import tpu as pltpu


def _mlp_kernel(x_ref, w1_ref, t1_ref, w2_ref, t2_ref, w3_ref, b3_ref, o_ref):
    # x_ref : (C, TN)       f32    activation tile (channels-first); cast on the VPU
    # w1/w2 : (C, C)        bf16   conv weights with BN scale folded in
    # w3    : (out_dim, C)  bf16   final conv weight
    # t1/t2 : (C, 1)        f32    folded BN shift
    # b3    : (out_dim, 1)  f32    final conv bias
    # o_ref : (out_dim, TN) out_dtype
    x = x_ref[...].astype(w1_ref.dtype)

    # Layer 1: Conv1d(k=1, no bias) + BN(folded) -> ReLU (Dropout = identity, eval)
    h = jnp.dot(w1_ref[...], x, preferred_element_type=jnp.float32)
    h = jnp.maximum(h + t1_ref[...], 0.0).astype(w2_ref.dtype)

    # Layer 2: Conv1d(k=1, no bias) + BN(folded) -> ReLU (Dropout = identity, eval)
    h = jnp.dot(w2_ref[...], h, preferred_element_type=jnp.float32)
    h = jnp.maximum(h + t2_ref[...], 0.0).astype(w3_ref.dtype)

    # Layer 3: Conv1d(k=1, with bias)
    o_ref[...] = (jnp.dot(w3_ref[...], h, preferred_element_type=jnp.float32)
                  + b3_ref[...]).astype(o_ref.dtype)


def _round_up(v, m):
    return ((v + m - 1) // m) * m


def three_layer_mlp(x, params, *, tn_max=8192, out_dtype=jnp.float32):
    """x: (B, dim, N) float32  ->  (B, out_dim, N) out_dtype (eval-mode forward)."""
    B, C, N = x.shape
    w1, g1, be1, m1, v1, w2, g2, be2, m2, v2, w3, b3 = params
    out_dim = w3.shape[0]
    eps = 1e-5
    wdtype = jnp.bfloat16

    # --- Fold BatchNorm (eval mode) into the conv weights, in f32; cast weights last ---
    s1 = g1 * jax.lax.rsqrt(v1 + eps)                       # (C,)
    s2 = g2 * jax.lax.rsqrt(v2 + eps)                       # (C,)
    t1 = (be1 - m1 * s1).reshape(C, 1).astype(jnp.float32)
    t2 = (be2 - m2 * s2).reshape(C, 1).astype(jnp.float32)
    w1k = (w1[:, :, 0] * s1[:, None]).astype(wdtype)         # (C, C)
    w2k = (w2[:, :, 0] * s2[:, None]).astype(wdtype)         # (C, C)
    w3k = w3[:, :, 0].astype(wdtype)                         # (out_dim, C)
    b3r = b3.reshape(out_dim, 1).astype(jnp.float32)

    # --- Generation-aware VMEM budget -> lane-tile size TN -----------------------------
    try:
        vmem_cap = int(pltpu.get_tpu_info().vmem_capacity_bytes)
    except Exception:
        vmem_cap = 64 * 1024 * 1024                          # conservative (v7x per-TC)
    vmem_limit = min(vmem_cap * 3 // 4, 96 * 1024 * 1024)    # v5e/v6e: 96 MiB, v7x: 48 MiB
    tile_budget = vmem_limit - 8 * 1024 * 1024               # headroom for Mosaic scratch

    xbytes = jnp.dtype(x.dtype).itemsize                     # f32 in, cast inside kernel
    obytes = jnp.dtype(out_dtype).itemsize
    # Per lane-column: double-buffered x + out tiles, plus ~3 live f32 (C, TN)
    # intermediates inside the kernel body (the hidden VMEM consumer on v7x).
    bytes_per_tn = 2 * C * xbytes + 2 * out_dim * obytes + 3 * C * 4
    fixed_bytes = 2 * (2 * C * C + out_dim * C) * 2 + 2 * (2 * C + out_dim) * 4
    tn_fit = max(128, (tile_budget - fixed_bytes) // bytes_per_tn)

    # Lane-dense N: pad up to a multiple of 128 so stores are unmasked (no vst.msk).
    n_pad = _round_up(N, 128)
    tn = int(min(tn_max, tn_fit, n_pad))
    # Prefer a multiple of 256 (v6e/v7x MXU width); fall back to 128.
    tn = (tn // 256) * 256 if tn >= 256 else _round_up(tn, 128)
    tn = min(tn, n_pad)
    n_pad = _round_up(n_pad, tn)                             # no ragged last tile
    n_tiles = n_pad // tn
    # v7x megacore balance: avoid an odd total grid when it is cheap to fix.
    if (B * n_tiles) % 2 == 1 and tn % 256 == 0:
        tn //= 2
        n_tiles = n_pad // tn

    if n_pad != N:
        x = jnp.pad(x, ((0, 0), (0, 0), (0, n_pad - N)))

    # --- Specs -------------------------------------------------------------------------
    x_spec = pl.BlockSpec((None, C, tn), lambda b, n: (b, 0, n))
    w_cc_spec = pl.BlockSpec((C, C), lambda b, n: (0, 0))
    t_spec = pl.BlockSpec((C, 1), lambda b, n: (0, 0))
    w3_spec = pl.BlockSpec((out_dim, C), lambda b, n: (0, 0))
    b3_spec = pl.BlockSpec((out_dim, 1), lambda b, n: (0, 0))
    out_spec = pl.BlockSpec((None, out_dim, tn), lambda b, n: (b, 0, n))

    flops = 2 * B * n_pad * (2 * C * C + C * out_dim)
    bytes_accessed = (B * C * n_pad * xbytes + B * out_dim * n_pad * obytes
                      + (2 * C * C + out_dim * C) * 2 + (2 * C + out_dim) * 4)
    cost = pl.CostEstimate(flops=flops, transcendentals=0,
                           bytes_accessed=bytes_accessed)

    out = pl.pallas_call(
        _mlp_kernel,
        out_shape=jax.ShapeDtypeStruct((B, out_dim, n_pad), out_dtype),
        grid_spec=pltpu.PrefetchScalarGridSpec(
            num_scalar_prefetch=0,
            grid=(B, n_tiles),
            in_specs=[x_spec, w_cc_spec, t_spec, w_cc_spec, t_spec,
                      w3_spec, b3_spec],
            out_specs=out_spec,
        ),
        compiler_params=pltpu.CompilerParams(
            dimension_semantics=("parallel", "parallel"),
            vmem_limit_bytes=int(vmem_limit),
        ),
        cost_estimate=cost,
    )(x, w1k, t1, w2k, t2, w3k, b3r)

    if n_pad != N:
        out = out[:, :, :N]
    return out


def _reference(x, params):
    """Pure-JAX f32 reference of the same forward pass (eval mode)."""
    w1, g1, be1, m1, v1, w2, g2, be2, m2, v2, w3, b3 = params
    eps = 1e-5

    def bn(h, g, be, m, v):
        return (h - m[None, :, None]) / jnp.sqrt(v[None, :, None] + eps) \
            * g[None, :, None] + be[None, :, None]

    h = jnp.einsum('oc,bcn->bon', w1[:, :, 0], x)
    h = jnp.maximum(bn(h, g1, be1, m1, v1), 0.0)
    h = jnp.einsum('oc,bcn->bon', w2[:, :, 0], h)
    h = jnp.maximum(bn(h, g2, be2, m2, v2), 0.0)
    h = jnp.einsum('oc,bcn->bon', w3[:, :, 0], h) + b3[None, :, None]
    return h


def _init_params(key, dim, out_dim):
    ks = jax.random.split(key, 12)
    w1 = jax.random.normal(ks[0], (dim, dim, 1), jnp.float32) * 0.1
    g1 = 1.0 + 0.1 * jax.random.normal(ks[1], (dim,), jnp.float32)
    be1 = 0.1 * jax.random.normal(ks[2], (dim,), jnp.float32)
    m1 = 0.05 * jax.random.normal(ks[3], (dim,), jnp.float32)
    v1 = jnp.ones((dim,), jnp.float32) + 0.1 * jax.random.uniform(ks[4], (dim,))
    w2 = jax.random.normal(ks[5], (dim, dim, 1), jnp.float32) * 0.1
    g2 = 1.0 + 0.1 * jax.random.normal(ks[6], (dim,), jnp.float32)
    be2 = 0.1 * jax.random.normal(ks[7], (dim,), jnp.float32)
    m2 = 0.05 * jax.random.normal(ks[8], (dim,), jnp.float32)
    v2 = jnp.ones((dim,), jnp.float32) + 0.1 * jax.random.uniform(ks[9], (dim,))
    w3 = jax.random.normal(ks[10], (out_dim, dim, 1), jnp.float32) * 0.1
    b3 = 0.1 * jax.random.normal(ks[11], (out_dim,), jnp.float32)
    return (w1, g1, be1, m1, v1, w2, g2, be2, m2, v2, w3, b3)


if __name__ == "__main__":
    key = jax.random.PRNGKey(0)
    B, dim, out_dim, N = 2, 32, 16, 512

    kx, kp = jax.random.split(key)
    x = jax.random.normal(kx, (B, dim, N), jnp.float32)
    params = _init_params(kp, dim, out_dim)

    # tn_max=256 -> grid (B, N//256) = (2, 2): exercises the pipelined multi-tile path.
    out = jax.block_until_ready(three_layer_mlp(x, params, tn_max=256))
    ref = jax.block_until_ready(_reference(x, params))
    assert out.shape == (B, out_dim, N), out.shape
    max_err = float(jnp.max(jnp.abs(out - ref)))
    assert max_err < 5e-2, max_err          # bf16 weight path vs f32 reference

    # Ragged-N path: internally padded to a lane-dense multiple, result sliced back.
    N2 = 300
    x2 = jax.random.normal(kx, (1, dim, N2), jnp.float32)
    out2 = jax.block_until_ready(three_layer_mlp(x2, params))
    ref2 = _reference(x2, params)
    assert out2.shape == (1, out_dim, N2), out2.shape
    max_err2 = float(jnp.max(jnp.abs(out2 - ref2)))
    assert max_err2 < 5e-2, max_err2

    print("KERNEL_OK")
</pallas_src>

<mosaic_0001>
module attributes {stable_mosaic.version = 11 : i64} {
  func.func @_mlp_kernel(%arg0: i32, %arg1: i32, %arg2: memref<1x32x256xf32, #tpu.memory_space<vmem>>, %arg3: memref<32x32xbf16, #tpu.memory_space<vmem>>, %arg4: memref<32x1xf32, #tpu.memory_space<vmem>>, %arg5: memref<32x32xbf16, #tpu.memory_space<vmem>>, %arg6: memref<32x1xf32, #tpu.memory_space<vmem>>, %arg7: memref<16x32xbf16, #tpu.memory_space<vmem>>, %arg8: memref<16x1xf32, #tpu.memory_space<vmem>>, %arg9: memref<1x16x256xf32, #tpu.memory_space<vmem>>) attributes {dimension_semantics = [#tpu.dimension_semantics<parallel>, #tpu.dimension_semantics<parallel>], iteration_bounds = array<i64: 2, 2>, scalar_prefetch = 0 : i64, scratch_operands = 0 : i64, tpu.core_type = #tpu.core_type<tc>, window_params = [{transform_indices = @transform_0, window_bounds = array<i64: 1, 32, 256>}, {pipeline_mode = #tpu.pipeline_mode<synchronous>, transform_indices = @transform_1, window_bounds = array<i64: 32, 32>}, {pipeline_mode = #tpu.pipeline_mode<synchronous>, transform_indices = @transform_2, window_bounds = array<i64: 32, 1>}, {pipeline_mode = #tpu.pipeline_mode<synchronous>, transform_indices = @transform_3, window_bounds = array<i64: 32, 32>}, {pipeline_mode = #tpu.pipeline_mode<synchronous>, transform_indices = @transform_4, window_bounds = array<i64: 32, 1>}, {pipeline_mode = #tpu.pipeline_mode<synchronous>, transform_indices = @transform_5, window_bounds = array<i64: 16, 32>}, {pipeline_mode = #tpu.pipeline_mode<synchronous>, transform_indices = @transform_6, window_bounds = array<i64: 16, 1>}, {transform_indices = @transform_7, window_bounds = array<i64: 1, 16, 256>}]} {
    %c0 = arith.constant 0 : index
    %c0_0 = arith.constant 0 : index
    %c0_1 = arith.constant 0 : index
    %0 = vector.load %arg2[%c0, %c0_0, %c0_1] : memref<1x32x256xf32, #tpu.memory_space<vmem>>, vector<1x32x256xf32>
    %1 = vector.shape_cast %0 : vector<1x32x256xf32> to vector<32x256xf32>
    %2 = arith.truncf %1 : vector<32x256xf32> to vector<32x256xbf16>
    %c0_2 = arith.constant 0 : index
    %c0_3 = arith.constant 0 : index
    %3 = vector.load %arg3[%c0_2, %c0_3] : memref<32x32xbf16, #tpu.memory_space<vmem>>, vector<32x32xbf16>
    %cst = arith.constant dense<0.000000e+00> : vector<32x256xf32>
    %4 = tpu.matmul %3, %2, %cst {dimension_numbers = #tpu.dot_dimension_numbers<[1], [0], [0], [1], [0, 0, 1, 1], [], []>} : vector<32x32xbf16>, vector<32x256xbf16>, vector<32x256xf32> -> vector<32x256xf32>
    %c0_4 = arith.constant 0 : index
    %c0_5 = arith.constant 0 : index
    %5 = vector.load %arg4[%c0_4, %c0_5] : memref<32x1xf32, #tpu.memory_space<vmem>>, vector<32x1xf32>
    %6 = vector.broadcast %5 : vector<32x1xf32> to vector<32x256xf32>
    %7 = arith.addf %4, %6 : vector<32x256xf32>
    %cst_6 = arith.constant 0.000000e+00 : f32
    %8 = vector.broadcast %cst_6 : f32 to vector<32x256xf32>
    %9 = arith.maximumf %7, %8 : vector<32x256xf32>
    %10 = arith.truncf %9 : vector<32x256xf32> to vector<32x256xbf16>
    %c0_7 = arith.constant 0 : index
    %c0_8 = arith.constant 0 : index
    %11 = vector.load %arg5[%c0_7, %c0_8] : memref<32x32xbf16, #tpu.memory_space<vmem>>, vector<32x32xbf16>
    %cst_9 = arith.constant dense<0.000000e+00> : vector<32x256xf32>
    %12 = tpu.matmul %11, %10, %cst_9 {dimension_numbers = #tpu.dot_dimension_numbers<[1], [0], [0], [1], [0, 0, 1, 1], [], []>} : vector<32x32xbf16>, vector<32x256xbf16>, vector<32x256xf32> -> vector<32x256xf32>
    %c0_10 = arith.constant 0 : index
    %c0_11 = arith.constant 0 : index
    %13 = vector.load %arg6[%c0_10, %c0_11] : memref<32x1xf32, #tpu.memory_space<vmem>>, vector<32x1xf32>
    %14 = vector.broadcast %13 : vector<32x1xf32> to vector<32x256xf32>
    %15 = arith.addf %12, %14 : vector<32x256xf32>
    %cst_12 = arith.constant 0.000000e+00 : f32
    %16 = vector.broadcast %cst_12 : f32 to vector<32x256xf32>
    %17 = arith.maximumf %15, %16 : vector<32x256xf32>
    %18 = arith.truncf %17 : vector<32x256xf32> to vector<32x256xbf16>
    %c0_13 = arith.constant 0 : index
    %c0_14 = arith.constant 0 : index
    %19 = vector.load %arg7[%c0_13, %c0_14] : memref<16x32xbf16, #tpu.memory_space<vmem>>, vector<16x32xbf16>
    %cst_15 = arith.constant dense<0.000000e+00> : vector<16x256xf32>
    %20 = tpu.matmul %19, %18, %cst_15 {dimension_numbers = #tpu.dot_dimension_numbers<[1], [0], [0], [1], [0, 0, 1, 1], [], []>} : vector<16x32xbf16>, vector<32x256xbf16>, vector<16x256xf32> -> vector<16x256xf32>
    %c0_16 = arith.constant 0 : index
    %c0_17 = arith.constant 0 : index
    %21 = vector.load %arg8[%c0_16, %c0_17] : memref<16x1xf32, #tpu.memory_space<vmem>>, vector<16x1xf32>
    %22 = vector.broadcast %21 : vector<16x1xf32> to vector<16x256xf32>
    %23 = arith.addf %20, %22 : vector<16x256xf32>
    %c0_18 = arith.constant 0 : index
    %c0_19 = arith.constant 0 : index
    %c0_20 = arith.constant 0 : index
    %24 = vector.load %arg9[%c0_18, %c0_19, %c0_20] : memref<1x16x256xf32, #tpu.memory_space<vmem>>, vector<1x16x256xf32>
    %25 = vector.shape_cast %24 : vector<1x16x256xf32> to vector<16x256xf32>
    %26 = vector.shape_cast %23 : vector<16x256xf32> to vector<1x16x256xf32>
    tpu.vector_store %arg9[%c0_18, %c0_19, %c0_20], %26 {strides = array<i32>} : memref<1x16x256xf32, #tpu.memory_space<vmem>>, vector<1x16x256xf32>,
    return
  }
  func.func @transform_0(%arg0: i32, %arg1: i32) -> (i32, i32, i32) {
    %c0_i32 = arith.constant 0 : i32
    %c0_i32_0 = arith.constant 0 : i32
    return %arg0, %c0_i32, %arg1 : i32, i32, i32
  }
  func.func @transform_1(%arg0: i32, %arg1: i32) -> (i32, i32) {
    %c0_i32 = arith.constant 0 : i32
    %c0_i32_0 = arith.constant 0 : i32
    %c0_i32_1 = arith.constant 0 : i32
    return %c0_i32, %c0_i32_0 : i32, i32
  }
  func.func @transform_2(%arg0: i32, %arg1: i32) -> (i32, i32) {
    %c0_i32 = arith.constant 0 : i32
    %c0_i32_0 = arith.constant 0 : i32
    %c0_i32_1 = arith.constant 0 : i32
    return %c0_i32, %c0_i32_0 : i32, i32
  }
  func.func @transform_3(%arg0: i32, %arg1: i32) -> (i32, i32) {
    %c0_i32 = arith.constant 0 : i32
    %c0_i32_0 = arith.constant 0 : i32
    %c0_i32_1 = arith.constant 0 : i32
    return %c0_i32, %c0_i32_0 : i32, i32
  }
  func.func @transform_4(%arg0: i32, %arg1: i32) -> (i32, i32) {
    %c0_i32 = arith.constant 0 : i32
    %c0_i32_0 = arith.constant 0 : i32
    %c0_i32_1 = arith.constant 0 : i32
    return %c0_i32, %c0_i32_0 : i32, i32
  }
  func.func @transform_5(%arg0: i32, %arg1: i32) -> (i32, i32) {
    %c0_i32 = arith.constant 0 : i32
    %c0_i32_0 = arith.constant 0 : i32
    %c0_i32_1 = arith.constant 0 : i32
    return %c0_i32, %c0_i32_0 : i32, i32
  }
  func.func @transform_6(%arg0: i32, %arg1: i32) -> (i32, i32) {
    %c0_i32 = arith.constant 0 : i32
    %c0_i32_0 = arith.constant 0 : i32
    %c0_i32_1 = arith.constant 0 : i32
    return %c0_i32, %c0_i32_0 : i32, i32
  }
  func.func @transform_7(%arg0: i32, %arg1: i32) -> (i32, i32, i32) {
    %c0_i32 = arith.constant 0 : i32
    %c0_i32_0 = arith.constant 0 : i32
    return %arg0, %c0_i32, %arg1 : i32, i32, i32
  }
}

</mosaic_0001>

<llo_original>
// kernel: tpu_custom_call.1
$region0: #{tpu_custom_call.1}
  #allocation0 [shape = 'u32[]', space=smem, size = 0x4, offset = 0x4, fixed_abs, tag = 'smem constant byte address 0x4 - core index']
  #allocation1 [shape = 'u32[144,128]{1,0:T(1,128)}', space=vmem, size = 0x12000, scoped, tag = 'internal scratch']
  %s0 = inlined_call_operand.hbm [shape: f32[2,32,512], index: 0, kind: input, shape index: {}]
  %s1 = inlined_call_operand.vmem [shape: bf16[32,32], index: 1, kind: input, shape index: {}]
  %s2 = inlined_call_operand.vmem [shape: f32[32,1], index: 2, kind: input, shape index: {}]
  %s3 = inlined_call_operand.vmem [shape: bf16[32,32], index: 3, kind: input, shape index: {}]
  %s4 = inlined_call_operand.vmem [shape: f32[32,1], index: 4, kind: input, shape index: {}]
  %s5 = inlined_call_operand.vmem [shape: bf16[16,32], index: 5, kind: input, shape index: {}]
  %s6 = inlined_call_operand.vmem [shape: f32[16,1], index: 6, kind: input, shape index: {}]
  %s7 = inlined_call_operand.hbm [shape: f32[2,16,512], index: 7, kind: output, shape index: {}]
  %s8 = sld [smem:[#allocation0]]
  $region65: #{tpu_custom_call.1} parent=0
    _
  %s10 = ssub.s32 1, %s8
  %s11 = scalar_select 0, %s10, %s8
  $region1: #{tpu_custom_call.1} parent=0
    #allocation2 [shape = 'u8[65536]{0}', space=vmem, size = 0x10000, scoped, tag = 'input window, operand 0']
    #allocation3 [shape = 's32[2]{0}', space=sflag, size = 0x8, scoped, tag = 'scoped memory for tpu_custom_call.1']
    #allocation4 [shape = 's32[2]{0}', space=sflag, size = 0x8, scoped, tag = 'scoped memory for tpu_custom_call.1']
    #allocation5 [shape = 'u8[32768]{0}', space=vmem, size = 0x8000, scoped, tag = 'output window, operand 0']
    %12 = vsyncpa [#allocation3], 0
    %s13 = scalar_lea.sflag [#allocation3], 1
    %14 = vsyncpa %s13, 0
    %15 = vsyncpa [#allocation4], 0
    %s16 = scalar_lea.sflag [#allocation4], 1
    %17 = vsyncpa %s16, 0
    loop: start=0, step=1, limit=6
    $region2: #{tpu_custom_call.1} parent=1 // loop_pre_header
      _
    $region3: #{tpu_custom_call.1} parent=1 // loop_header
      %s19 = sphi 0, %s23
      %p20 = scmp.ge.s32.totalorder %s19, 6
      %s26 = sphi 0, %s38
      %s27 = sphi 0, %s34
      %s28 = sphi 0, %s26
      %s29 = sphi 0, %s27
      %s30 = sphi 0, %s28
      %s31 = sphi 0, %s29
      %s43 = sphi 0, %s45
      %s46 = sphi 0, %s43
      %s47 = sphi 0, %s46
      %s63 = sphi 0, %s47
      %s67 = sphi 0, %s67
      %s69 = sphi 0, %s67
      %s70 = sphi 0, %s69
      %s84 = sphi 0, %s70
      %s88 = sphi 0, %s88
      %s90 = sphi 0, %s88
      %s91 = sphi 0, %s90
      %s105 = sphi 0, %s91
      %s109 = sphi 0, %s109
      %s111 = sphi 0, %s109
      %s112 = sphi 0, %s111
      %s126 = sphi 0, %s112
      %s130 = sphi 0, %s130
      %s132 = sphi 0, %s130
      %s133 = sphi 0, %s132
      %s147 = sphi 0, %s133
      %s151 = sphi 0, %s151
      %s153 = sphi 0, %s151
      %s154 = sphi 0, %s153
      %s168 = sphi 0, %s154
      %s172 = sphi 0, %s172
      %s174 = sphi 0, %s172
      %s175 = sphi 0, %s174
      %s189 = sphi 0, %s175
      %s197 = sphi 0, %s199
      %s200 = sphi 0, %s197
      %s201 = sphi 0, %s200
      %s217 = sphi 0, %s201
    $region4: #{tpu_custom_call.1} parent=1 // loop_header_branch
      %22 = sbr.rel (%p20) target = $region8
    $region5: #{tpu_custom_call.1} parent=1 // loop_body
      %s24 = ssub.s32 %s19, 1
      %s25 = ssub.s32 %s19, 2
      %s32 = sadd.s32 1, %s27
      %p33 = scmp.ge.s32.totalorder %s32, 2
      %s34 = scalar_select %p33, 0, %s32
      %s35 = sadd.s32 1, %s26
      %s36 = scalar_select %p33, %s35, %s26
      %p37 = scmp.ge.s32.totalorder %s36, 2
      %s38 = scalar_select %p37, 0, %s36
      %s39 = ssub.s32 %s26, %s38
      %s40 = ssub.s32 %s27, %s34
      %s41 = sor.u32 %s39, %s40
      %p42 = scmp.eq.s32.totalorder %s41, 0
      %s44 = sadd.s32 %s43, 1
      %s45 = scalar_select %p42, %s43, %s44
      %p48 = pneg %p42
      %p49 = scmp.eq.s32.totalorder %s19, 3
      %p50 = por %p48, %p49
      %p51 = scmp.ne.s32.totalorder %s43, %s46
      %p52 = scmp.eq.s32.totalorder %s19, 0
      %p53 = por %p51, %p52
      %p54 = scmp.ne.s32.totalorder %s43, %s46
      %p55 = scmp.eq.s32.totalorder %s24, 3
      %p56 = por %p54, %p55
      %p57 = scmp.ne.s32.totalorder %s46, %s47
      %p58 = scmp.eq.s32.totalorder %s24, 0
      %p59 = por %p57, %p58
      %p60 = scmp.ne.s32.totalorder %s46, %s47
      %p61 = scmp.eq.s32.totalorder %s25, 3
      %p62 = por %p60, %p61
      %p64 = scmp.ne.s32.totalorder %s47, %s63
      %p65 = scmp.eq.s32.totalorder %s25, 0
      %p66 = por %p64, %p65
      %s68 = sadd.s32 %s67, 1
      %p71 = scmp.eq.s32.totalorder %s19, 3
      %p72 = scmp.ne.s32.totalorder %s67, %s69
      %p73 = scmp.eq.s32.totalorder %s19, 0
      %p74 = por %p72, %p73
      %p75 = scmp.ne.s32.totalorder %s67, %s69
      %p76 = scmp.eq.s32.totalorder %s24, 3
      %p77 = por %p75, %p76
      %p78 = scmp.ne.s32.totalorder %s69, %s70
      %p79 = scmp.eq.s32.totalorder %s24, 0
      %p80 = por %p78, %p79
      %p81 = scmp.ne.s32.totalorder %s69, %s70
      %p82 = scmp.eq.s32.totalorder %s25, 3
      %p83 = por %p81, %p82
      %p85 = scmp.ne.s32.totalorder %s70, %s84
      %p86 = scmp.eq.s32.totalorder %s25, 0
      %p87 = por %p85, %p86
      %s89 = sadd.s32 %s88, 1
      %p92 = scmp.eq.s32.totalorder %s19, 3
      %p93 = scmp.ne.s32.totalorder %s88, %s90
      %p94 = scmp.eq.s32.totalorder %s19, 0
      %p95 = por %p93, %p94
      %p96 = scmp.ne.s32.totalorder %s88, %s90
      %p97 = scmp.eq.s32.totalorder %s24, 3
      %p98 = por %p96, %p97
      %p99 = scmp.ne.s32.totalorder %s90, %s91
      %p100 = scmp.eq.s32.totalorder %s24, 0
      %p101 = por %p99, %p100
      %p102 = scmp.ne.s32.totalorder %s90, %s91
      %p103 = scmp.eq.s32.totalorder %s25, 3
      %p104 = por %p102, %p103
      %p106 = scmp.ne.s32.totalorder %s91, %s105
      %p107 = scmp.eq.s32.totalorder %s25, 0
      %p108 = por %p106, %p107
      %s110 = sadd.s32 %s109, 1
      %p113 = scmp.eq.s32.totalorder %s19, 3
      %p114 = scmp.ne.s32.totalorder %s109, %s111
      %p115 = scmp.eq.s32.totalorder %s19, 0
      %p116 = por %p114, %p115
      %p117 = scmp.ne.s32.totalorder %s109, %s111
      %p118 = scmp.eq.s32.totalorder %s24, 3
      %p119 = por %p117, %p118
      %p120 = scmp.ne.s32.totalorder %s111, %s112
      %p121 = scmp.eq.s32.totalorder %s24, 0
      %p122 = por %p120, %p121
      %p123 = scmp.ne.s32.totalorder %s111, %s112
      %p124 = scmp.eq.s32.totalorder %s25, 3
      %p125 = por %p123, %p124
      %p127 = scmp.ne.s32.totalorder %s112, %s126
      %p128 = scmp.eq.s32.totalorder %s25, 0
      %p129 = por %p127, %p128
      %s131 = sadd.s32 %s130, 1
      %p134 = scmp.eq.s32.totalorder %s19, 3
      %p135 = scmp.ne.s32.totalorder %s130, %s132
      %p136 = scmp.eq.s32.totalorder %s19, 0
      %p137 = por %p135, %p136
      %p138 = scmp.ne.s32.totalorder %s130, %s132
      %p139 = scmp.eq.s32.totalorder %s24, 3
      %p140 = por %p138, %p139
      %p141 = scmp.ne.s32.totalorder %s132, %s133
      %p142 = scmp.eq.s32.totalorder %s24, 0
      %p143 = por %p141, %p142
      %p144 = scmp.ne.s32.totalorder %s132, %s133
      %p145 = scmp.eq.s32.totalorder %s25, 3
      %p146 = por %p144, %p145
      %p148 = scmp.ne.s32.totalorder %s133, %s147
      %p149 = scmp.eq.s32.totalorder %s25, 0
      %p150 = por %p148, %p149
      %s152 = sadd.s32 %s151, 1
      %p155 = scmp.eq.s32.totalorder %s19, 3
      %p156 = scmp.ne.s32.totalorder %s151, %s153
      %p157 = scmp.eq.s32.totalorder %s19, 0
      %p158 = por %p156, %p157
      %p159 = scmp.ne.s32.totalorder %s151, %s153
      %p160 = scmp.eq.s32.totalorder %s24, 3
      %p161 = por %p159, %p160
      %p162 = scmp.ne.s32.totalorder %s153, %s154
      %p163 = scmp.eq.s32.totalorder %s24, 0
      %p164 = por %p162, %p163
      %p165 = scmp.ne.s32.totalorder %s153, %s154
      %p166 = scmp.eq.s32.totalorder %s25, 3
      %p167 = por %p165, %p166
      %p169 = scmp.ne.s32.totalorder %s154, %s168
      %p170 = scmp.eq.s32.totalorder %s25, 0
      %p171 = por %p169, %p170
      %s173 = sadd.s32 %s172, 1
      %p176 = scmp.eq.s32.totalorder %s19, 3
      %p177 = scmp.ne.s32.totalorder %s172, %s174
      %p178 = scmp.eq.s32.totalorder %s19, 0
      %p179 = por %p177, %p178
      %p180 = scmp.ne.s32.totalorder %s172, %s174
      %p181 = scmp.eq.s32.totalorder %s24, 3
      %p182 = por %p180, %p181
      %p183 = scmp.ne.s32.totalorder %s174, %s175
      %p184 = scmp.eq.s32.totalorder %s24, 0
      %p185 = por %p183, %p184
      %p186 = scmp.ne.s32.totalorder %s174, %s175
      %p187 = scmp.eq.s32.totalorder %s25, 3
      %p188 = por %p186, %p187
      %p190 = scmp.ne.s32.totalorder %s175, %s189
      %p191 = scmp.eq.s32.totalorder %s25, 0
      %p192 = por %p190, %p191
      %s193 = ssub.s32 %s26, %s38
      %s194 = ssub.s32 %s27, %s34
      %s195 = sor.u32 %s193, %s194
      %p196 = scmp.eq.s32.totalorder %s195, 0
      %s198 = sadd.s32 %s197, 1
      %s199 = scalar_select %p196, %s197, %s198
      %p202 = pneg %p196
      %p203 = scmp.eq.s32.totalorder %s19, 3
      %p204 = por %p202, %p203
      %p205 = scmp.ne.s32.totalorder %s197, %s200
      %p206 = scmp.eq.s32.totalorder %s19, 0
      %p207 = por %p205, %p206
      %p208 = scmp.ne.s32.totalorder %s197, %s200
      %p209 = scmp.eq.s32.totalorder %s24, 3
      %p210 = por %p208, %p209
      %p211 = scmp.ne.s32.totalorder %s200, %s201
      %p212 = scmp.eq.s32.totalorder %s24, 0
      %p213 = por %p211, %p212
      %p214 = scmp.ne.s32.totalorder %s200, %s201
      %p215 = scmp.eq.s32.totalorder %s25, 3
      %p216 = por %p214, %p215
      %p218 = scmp.ne.s32.totalorder %s201, %s217
      %p219 = scmp.eq.s32.totalorder %s25, 0
      %p220 = por %p218, %p219
      %p221 = scmp.le.s32.totalorder 1, %s19
      %p222 = scmp.lt.s32.totalorder %s19, 5
      %p223 = pnand %p221, %p222
      %p224 = pneg %p223
      // Predicated region
      $region9: #{tpu_custom_call.1} parent=5 // pred_check
        _
      $region10: #{tpu_custom_call.1} parent=5 // pred_check_branch
        %226 = sbr.rel (%p223) target = $region12
      $region11: #{tpu_custom_call.1} parent=5 // pred_region
        %s227 = ssub.s32 %s19, 1
        // Predicated region
        $region13: #{tpu_custom_call.1} parent=11 // pred_check
          %p228 = pneg %p80
        $region14: #{tpu_custom_call.1} parent=11 // pred_check_branch
          %230 = sbr.rel (%p228) target = $region16
        $region15: #{tpu_custom_call.1} parent=11 // pred_region
          _
        $region16: #{tpu_custom_call.1} parent=11 // pred_fallthru
          _
        // Predicated region
        $region17: #{tpu_custom_call.1} parent=11 // pred_check
          %p231 = pneg %p101
        $region18: #{tpu_custom_call.1} parent=11 // pred_check_branch
          %233 = sbr.rel (%p231) target = $region20
        $region19: #{tpu_custom_call.1} parent=11 // pred_region
          _
        $region20: #{tpu_custom_call.1} parent=11 // pred_fallthru
          _
        // Predicated region
        $region21: #{tpu_custom_call.1} parent=11 // pred_check
          %p234 = pneg %p122
        $region22: #{tpu_custom_call.1} parent=11 // pred_check_branch
          %236 = sbr.rel (%p234) target = $region24
        $region23: #{tpu_custom_call.1} parent=11 // pred_region
          _
        $region24: #{tpu_custom_call.1} parent=11 // pred_fallthru
          _
        // Predicated region
        $region25: #{tpu_custom_call.1} parent=11 // pred_check
          %p237 = pneg %p143
        $region26: #{tpu_custom_call.1} parent=11 // pred_check_branch
          %239 = sbr.rel (%p237) target = $region28
        $region27: #{tpu_custom_call.1} parent=11 // pred_region
          _
        $region28: #{tpu_custom_call.1} parent=11 // pred_fallthru
          _
        // Predicated region
        $region29: #{tpu_custom_call.1} parent=11 // pred_check
          %p240 = pneg %p164
        $region30: #{tpu_custom_call.1} parent=11 // pred_check_branch
          %242 = sbr.rel (%p240) target = $region32
        $region31: #{tpu_custom_call.1} parent=11 // pred_region
          _
        $region32: #{tpu_custom_call.1} parent=11 // pred_fallthru
          _
        // Predicated region
        $region33: #{tpu_custom_call.1} parent=11 // pred_check
          %p243 = pneg %p185
        $region34: #{tpu_custom_call.1} parent=11 // pred_check_branch
          %245 = sbr.rel (%p243) target = $region36
        $region35: #{tpu_custom_call.1} parent=11 // pred_region
          _
        $region36: #{tpu_custom_call.1} parent=11 // pred_fallthru
          _
      $region12: #{tpu_custom_call.1} parent=5 // pred_fallthru
        _
      %p246 = scmp.lt.s32.totalorder %s19, 4
      // Predicated region
      $region37: #{tpu_custom_call.1} parent=5 // pred_check
        %p247 = pneg %p246
      $region38: #{tpu_custom_call.1} parent=5 // pred_check_branch
        %249 = sbr.rel (%p247) target = $region40
      $region39: #{tpu_custom_call.1} parent=5 // pred_region
        // Predicated region
        $region41: #{tpu_custom_call.1} parent=39 // pred_check
          %p250 = pneg %p53
        $region42: #{tpu_custom_call.1} parent=39 // pred_check_branch
          %252 = sbr.rel (%p250) target = $region44
        $region43: #{tpu_custom_call.1} parent=39 // pred_region
          %s253 = sand.u32 %s43, 1
          %s254 = scalar_lea.sflag [#allocation3], %s253
          %s255 = sand.u32 %s43, 1
          %s256 = smul.addr %s255, 64
          %s257 = scalar_lea.vmem [#allocation2], %s256
          %s258 = smul.u32 2, %s27
          %s260 = ssub.s32 1024, 1024
          %261 = vsyncadd %s254, %s260
          %s262 = smul.addr %s26, 16
          %s263 = sadd.s32 %s258, %s262
          %s264 = smul.addr %s263, 128
          %s265 = scalar_lea.hbm %s0, %s264
          %s266 = sshll.u32 %s257, 4
          %s267 = int_to_ptr.vmem [resolvable:$true] %s266
          %272 = dma.hbm_to_vmem [thread:$0]  %s265, 1024, %s267, %s254, 512, 256, 16
        $region44: #{tpu_custom_call.1} parent=39 // pred_fallthru
          _
      $region40: #{tpu_custom_call.1} parent=5 // pred_fallthru
        _
      %p273 = scmp.le.s32.totalorder 1, %s19
      %p274 = scmp.lt.s32.totalorder %s19, 5
      %p275 = pnand %p273, %p274
      %p276 = pneg %p275
      // Predicated region
      $region45: #{tpu_custom_call.1} parent=5 // pred_check
        _
      $region46: #{tpu_custom_call.1} parent=5 // pred_check_branch
        %278 = sbr.rel (%p275) target = $region48
      $region47: #{tpu_custom_call.1} parent=5 // pred_region
        %s279 = ssub.s32 %s19, 1
        %s280 = sand.u32 %s46, 1
        %s281 = scalar_lea.sflag [#allocation3], %s280
        %s282 = sand.u32 %s46, 1
        %s283 = smul.addr %s282, 64
        %s284 = scalar_lea.vmem [#allocation2], %s283
        // Predicated region
        $region49: #{tpu_custom_call.1} parent=47 // pred_check
          %p285 = pneg %p59
        $region50: #{tpu_custom_call.1} parent=47 // pred_check_branch
          %287 = sbr.rel (%p285) target = $region52
        $region51: #{tpu_custom_call.1} parent=47 // pred_region
          %288 = dma.done %s281, 1024
        $region52: #{tpu_custom_call.1} parent=47 // pred_fallthru
          _
        %s289 = sand.u32 %s46, 1
        %s290 = scalar_lea.sflag [#allocation3], %s289
        %s291 = sand.u32 %s46, 1
        %s292 = smul.addr %s291, 64
        %s293 = scalar_lea.vmem [#allocation2], %s292
        %p294 = pneg %p59
        %p295 = pneg %p56
        %p296 = pneg %p80
        %p297 = pneg %p77
        %p298 = pneg %p101
        %p299 = pneg %p98
        %p300 = pneg %p122
        %p301 = pneg %p119
        %p302 = pneg %p143
        %p303 = pneg %p140
        %p304 = pneg %p164
        %p305 = pneg %p161
        %p306 = pneg %p185
        %p307 = pneg %p182
        %p308 = pneg %p213
        %p309 = pneg %p210
        %s310 = sand.u32 %s200, 1
        %s311 = scalar_lea.sflag [#allocation4], %s310
        %s312 = sand.u32 %s200, 1
        %s313 = smul.addr %s312, 32
        %s314 = scalar_lea.vmem [#allocation5], %s313
        %s315 = smul.u32 2, %s29
        %s316 = smul.u32 2, %s29
        %v318 = vld [vmem:[%s284] sm:$0xff]
        %v319 = vld [vmem:[%s284 + $0x8] sm:$0xff]
        %v320 = vld [vmem:[%s284 + $0x10] sm:$0xff]
        %v321 = vld [vmem:[%s284 + $0x18] sm:$0xff]
        %v322 = vld [vmem:[%s284 + $0x20] sm:$0xff]
        %v323 = vld [vmem:[%s284 + $0x28] sm:$0xff]
        %v324 = vld [vmem:[%s284 + $0x30] sm:$0xff]
        %v325 = vld [vmem:[%s284 + $0x38] sm:$0xff]
        %v326 = vpack.c.bf16 %v320, %v318
        %v327 = vpack.c.bf16 %v321, %v319
        %v328 = vpack.c.bf16 %v324, %v322
        %v329 = vpack.c.bf16 %v325, %v323
        %v330 = vld [vmem:[%s1] sm:$0xf]
        %v331 = vld [vmem:[%s1 + $0x4] sm:$0xf]
        %v332 = vld [vmem:[%s1 + $0x8] sm:$0xf]
        %v333 = vld [vmem:[%s1 + $0xc] sm:$0xf]
        %v334 = vld [vmem:[%s2] sm:$0xff]
        %v335 = vld [vmem:[%s2 + $0x8] sm:$0xff]
        %v336 = vld [vmem:[%s2 + $0x10] sm:$0xff]
        %v337 = vld [vmem:[%s2 + $0x18] sm:$0xff]
        %339 = vset.pattern.permute.xlu0 0
        %340 = vperm.xlu0 %339, %v334
        %v341 = vpop.permute.xlu0 %340
        %344 = vset.pattern.permute.xlu0 0
        %345 = vperm.xlu0 %344, %v335
        %v346 = vpop.permute.xlu0 %345
        %349 = vset.pattern.permute.xlu0 0
        %350 = vperm.xlu0 %349, %v336
        %v351 = vpop.permute.xlu0 %350
        %354 = vset.pattern.permute.xlu0 0
        %355 = vperm.xlu0 %354, %v337
        %v356 = vpop.permute.xlu0 %355
        %v362 = vunpack.c.l.b16 %v330
        %v363 = vunpack.c.l.b16 %v331
        %v364 = vunpack.c.l.b16 %v332
        %v365 = vunpack.c.l.b16 %v333
        %v366 = vpack.c.b16 %v363, %v362
        %v367 = vpack.c.b16 %v365, %v364
        %vm368 = vcmask 261120
        %v370 = vsel %vm368, %v366, 0
        %v373 = vsel %vm368, %v367, 0
        %375 = vmatprep.subr.bf16.mxu0 %v327
        %376 = vmatpush1.bf16.msra.mxu0 %v326
        %377 = vmatprep.subr.bf16.mxu0 %v329
        %378 = vmatpush1.bf16.msra.mxu0 %v328
        %379 = vmatprep.subr.bf16.mxu0 0
        %380 = vmatpush1.bf16.msra.mxu0 0
        %381 = vmatprep.subr.bf16.mxu0 0
        %382 = vmatpush1.bf16.msra.mxu0 0
        %383 = vmatprep.subr.bf16.mxu0 0
        %384 = vmatpush1.bf16.msra.mxu0 0
        %385 = vmatprep.subr.bf16.mxu0 0
        %386 = vmatpush1.bf16.msra.mxu0 0
        %387 = vmatprep.subr.bf16.mxu0 0
        %388 = vmatpush1.bf16.msra.mxu0 0
        %389 = vmatprep.subr.bf16.mxu0 0
        %390 = vmatpush1.bf16.msra.mxu0 0
        %391 = vmatprep.subr.bf16.mxu0 0
        %392 = vmatpush1.bf16.msra.mxu0 0
        %393 = vmatprep.subr.bf16.mxu0 0
        %394 = vmatpush1.bf16.msra.mxu0 0
        %395 = vmatprep.subr.bf16.mxu0 0
        %396 = vmatpush1.bf16.msra.mxu0 0
        %397 = vmatprep.subr.bf16.mxu0 0
        %398 = vmatpush1.bf16.msra.mxu0 0
        %399 = vmatprep.subr.bf16.mxu0 0
        %400 = vmatpush1.bf16.msra.mxu0 0
        %401 = vmatprep.subr.bf16.mxu0 0
        %402 = vmatpush1.bf16.msra.mxu0 0
        %403 = vmatprep.subr.bf16.mxu0 0
        %404 = vmatpush1.bf16.msra.mxu0 0
        %405 = vmatprep.subr.bf16.mxu0 0
        %406 = vmatpush1.bf16.msra.mxu0 0
        %407 = vmatprep.mubr.bf16.mxu0 0
        %408 = vmatmul.mubr.bf16.gmra.mrb[0].mxu0 %v370
        %v409 = vpop.f32.mrb[0].mxu0
        %v410 = vadd.f32 %v341, %v409
        %v411 = vpop.f32.mrb[0].mxu0
        %v412 = vadd.f32 %v341, %v411
        %v413 = vpop.f32.mrb[0].mxu0
        %v414 = vadd.f32 %v346, %v413
        %v415 = vpop.f32.mrb[0].mxu0
        %v416 = vadd.f32 %v346, %v415
        %417 = vmatprep.mubr.bf16.mxu0 0
        %418 = vmatmul.mubr.bf16.gmra.mrb[0].mxu0 %v373
        %v419 = vpop.f32.mrb[0].mxu0
        %v420 = vadd.f32 %v351, %v419
        %v421 = vpop.f32.mrb[0].mxu0
        %v422 = vadd.f32 %v351, %v421
        %v423 = vpop.f32.mrb[0].mxu0
        %v424 = vadd.f32 %v356, %v423
        %v425 = vpop.f32.mrb[0].mxu0
        %v426 = vadd.f32 %v356, %v425
        %427 = vdwg.mxu0
        %v428 = vmax.f32 %v410, 0.0
        %v429 = vmax.f32 %v412, 0.0
        %v430 = vmax.f32 %v414, 0.0
        %v431 = vmax.f32 %v416, 0.0
        %v432 = vmax.f32 %v420, 0.0
        %v433 = vmax.f32 %v422, 0.0
        %v434 = vmax.f32 %v424, 0.0
        %v435 = vmax.f32 %v426, 0.0
        %v436 = vpack.c.bf16 %v430, %v428
        %v437 = vpack.c.bf16 %v431, %v429
        %v438 = vpack.c.bf16 %v434, %v432
        %v439 = vpack.c.bf16 %v435, %v433
        %v440 = vld [vmem:[%s3] sm:$0xf]
        %v441 = vld [vmem:[%s3 + $0x4] sm:$0xf]
        %v442 = vld [vmem:[%s3 + $0x8] sm:$0xf]
        %v443 = vld [vmem:[%s3 + $0xc] sm:$0xf]
        %v444 = vld [vmem:[%s4] sm:$0xff]
        %v445 = vld [vmem:[%s4 + $0x8] sm:$0xff]
        %v446 = vld [vmem:[%s4 + $0x10] sm:$0xff]
        %v447 = vld [vmem:[%s4 + $0x18] sm:$0xff]
        %449 = vset.pattern.permute.xlu0 0
        %450 = vperm.xlu0 %449, %v444
        %v451 = vpop.permute.xlu0 %450
        %454 = vset.pattern.permute.xlu0 0
        %455 = vperm.xlu0 %454, %v445
        %v456 = vpop.permute.xlu0 %455
        %459 = vset.pattern.permute.xlu0 0
        %460 = vperm.xlu0 %459, %v446
        %v461 = vpop.permute.xlu0 %460
        %464 = vset.pattern.permute.xlu0 0
        %465 = vperm.xlu0 %464, %v447
        %v466 = vpop.permute.xlu0 %465
        %v472 = vunpack.c.l.b16 %v440
        %v473 = vunpack.c.l.b16 %v441
        %v474 = vunpack.c.l.b16 %v442
        %v475 = vunpack.c.l.b16 %v443
        %v476 = vpack.c.b16 %v473, %v472
        %v477 = vpack.c.b16 %v475, %v474
        %v479 = vsel %vm368, %v476, 0
        %v482 = vsel %vm368, %v477, 0
        %484 = vmatprep.subr.bf16.mxu0 %v437
        %485 = vmatpush1.bf16.msra.mxu0 %v436
        %486 = vmatprep.subr.bf16.mxu0 %v439
        %487 = vmatpush1.bf16.msra.mxu0 %v438
        %488 = vmatprep.subr.bf16.mxu0 0
        %489 = vmatpush1.bf16.msra.mxu0 0
        %490 = vmatprep.subr.bf16.mxu0 0
        %491 = vmatpush1.bf16.msra.mxu0 0
        %492 = vmatprep.subr.bf16.mxu0 0
        %493 = vmatpush1.bf16.msra.mxu0 0
        %494 = vmatprep.subr.bf16.mxu0 0
        %495 = vmatpush1.bf16.msra.mxu0 0
        %496 = vmatprep.subr.bf16.mxu0 0
        %497 = vmatpush1.bf16.msra.mxu0 0
        %498 = vmatprep.subr.bf16.mxu0 0
        %499 = vmatpush1.bf16.msra.mxu0 0
        %500 = vmatprep.subr.bf16.mxu0 0
        %501 = vmatpush1.bf16.msra.mxu0 0
        %502 = vmatprep.subr.bf16.mxu0 0
        %503 = vmatpush1.bf16.msra.mxu0 0
        %504 = vmatprep.subr.bf16.mxu0 0
        %505 = vmatpush1.bf16.msra.mxu0 0
        %506 = vmatprep.subr.bf16.mxu0 0
        %507 = vmatpush1.bf16.msra.mxu0 0
        %508 = vmatprep.subr.bf16.mxu0 0
        %509 = vmatpush1.bf16.msra.mxu0 0
        %510 = vmatprep.subr.bf16.mxu0 0
        %511 = vmatpush1.bf16.msra.mxu0 0
        %512 = vmatprep.subr.bf16.mxu0 0
        %513 = vmatpush1.bf16.msra.mxu0 0
        %514 = vmatprep.subr.bf16.mxu0 0
        %515 = vmatpush1.bf16.msra.mxu0 0
        %516 = vmatprep.mubr.bf16.mxu0 0
        %517 = vmatmul.mubr.bf16.gmra.mrb[0].mxu0 %v479
        %v518 = vpop.f32.mrb[0].mxu0
        %v519 = vadd.f32 %v451, %v518
        %v520 = vpop.f32.mrb[0].mxu0
        %v521 = vadd.f32 %v451, %v520
        %v522 = vpop.f32.mrb[0].mxu0
        %v523 = vadd.f32 %v456, %v522
        %v524 = vpop.f32.mrb[0].mxu0
        %v525 = vadd.f32 %v456, %v524
        %526 = vmatprep.mubr.bf16.mxu0 0
        %527 = vmatmul.mubr.bf16.gmra.mrb[0].mxu0 %v482
        %v528 = vpop.f32.mrb[0].mxu0
        %v529 = vadd.f32 %v461, %v528
        %v530 = vpop.f32.mrb[0].mxu0
        %v531 = vadd.f32 %v461, %v530
        %v532 = vpop.f32.mrb[0].mxu0
        %v533 = vadd.f32 %v466, %v532
        %v534 = vpop.f32.mrb[0].mxu0
        %v535 = vadd.f32 %v466, %v534
        %536 = vdwg.mxu0
        %v537 = vmax.f32 %v519, 0.0
        %v538 = vmax.f32 %v521, 0.0
        %v539 = vmax.f32 %v523, 0.0
        %v540 = vmax.f32 %v525, 0.0
        %v541 = vmax.f32 %v529, 0.0
        %v542 = vmax.f32 %v531, 0.0
        %v543 = vmax.f32 %v533, 0.0
        %v544 = vmax.f32 %v535, 0.0
        %v545 = vpack.c.bf16 %v539, %v537
        %v546 = vpack.c.bf16 %v540, %v538
        %v547 = vpack.c.bf16 %v543, %v541
        %v548 = vpack.c.bf16 %v544, %v542
        %v549 = vld [vmem:[%s5] sm:$0xf]
        %v550 = vld [vmem:[%s5 + $0x4] sm:$0xf]
        %v551 = vld [vmem:[%s6] sm:$0xff]
        %v552 = vld [vmem:[%s6 + $0x8] sm:$0xff]
        %554 = vset.pattern.permute.xlu0 0
        %555 = vperm.xlu0 %554, %v551
        %v556 = vpop.permute.xlu0 %555
        %559 = vset.pattern.permute.xlu0 0
        %560 = vperm.xlu0 %559, %v552
        %v561 = vpop.permute.xlu0 %560
        %v565 = vunpack.c.l.b16 %v549
        %v566 = vunpack.c.l.b16 %v550
        %v567 = vpack.c.b16 %v566, %v565
        %v569 = vsel %vm368, %v567, 0
        %571 = vmatprep.subr.bf16.mxu0 %v546
        %572 = vmatpush1.bf16.msra.mxu0 %v545
        %573 = vmatprep.subr.bf16.mxu0 %v548
        %574 = vmatpush1.bf16.msra.mxu0 %v547
        %575 = vmatprep.subr.bf16.mxu0 0
        %576 = vmatpush1.bf16.msra.mxu0 0
        %577 = vmatprep.subr.bf16.mxu0 0
        %578 = vmatpush1.bf16.msra.mxu0 0
        %579 = vmatprep.subr.bf16.mxu0 0
        %580 = vmatpush1.bf16.msra.mxu0 0
        %581 = vmatprep.subr.bf16.mxu0 0
        %582 = vmatpush1.bf16.msra.mxu0 0
        %583 = vmatprep.subr.bf16.mxu0 0
        %584 = vmatpush1.bf16.msra.mxu0 0
        %585 = vmatprep.subr.bf16.mxu0 0
        %586 = vmatpush1.bf16.msra.mxu0 0
        %587 = vmatprep.subr.bf16.mxu0 0
        %588 = vmatpush1.bf16.msra.mxu0 0
        %589 = vmatprep.subr.bf16.mxu0 0
        %590 = vmatpush1.bf16.msra.mxu0 0
        %591 = vmatprep.subr.bf16.mxu0 0
        %592 = vmatpush1.bf16.msra.mxu0 0
        %593 = vmatprep.subr.bf16.mxu0 0
        %594 = vmatpush1.bf16.msra.mxu0 0
        %595 = vmatprep.subr.bf16.mxu0 0
        %596 = vmatpush1.bf16.msra.mxu0 0
        %597 = vmatprep.subr.bf16.mxu0 0
        %598 = vmatpush1.bf16.msra.mxu0 0
        %599 = vmatprep.subr.bf16.mxu0 0
        %600 = vmatpush1.bf16.msra.mxu0 0
        %601 = vmatprep.subr.bf16.mxu0 0
        %602 = vmatpush1.bf16.msra.mxu0 0
        %603 = vmatprep.mubr.bf16.mxu0 0
        %604 = vmatmul.mubr.bf16.gmra.mrb[0].mxu0 %v569
        %v605 = vpop.f32.mrb[0].mxu0
        %v606 = vadd.f32 %v556, %v605
        %v607 = vpop.f32.mrb[0].mxu0
        %v608 = vadd.f32 %v556, %v607
        %v609 = vpop.f32.mrb[0].mxu0
        %v610 = vadd.f32 %v561, %v609
        %v611 = vpop.f32.mrb[0].mxu0
        %v612 = vadd.f32 %v561, %v611
        %613 = vdwg.mxu0
        %614 = vst [vmem:[%s314] sm:$0xff] %v606
        %615 = vst [vmem:[%s314 + $0x8] sm:$0xff] %v608
        %616 = vst [vmem:[%s314 + $0x10] sm:$0xff] %v610
        %617 = vst [vmem:[%s314 + $0x18] sm:$0xff] %v612
        %s618 = sand.u32 %s200, 1
        %s619 = scalar_lea.sflag [#allocation4], %s618
        %s620 = sand.u32 %s200, 1
        %s621 = smul.addr %s620, 32
        %s622 = scalar_lea.vmem [#allocation5], %s621
        // Predicated region
        $region53: #{tpu_custom_call.1} parent=47 // pred_check
          %p623 = pneg %p210
        $region54: #{tpu_custom_call.1} parent=47 // pred_check_branch
          %625 = sbr.rel (%p623) target = $region56
        $region55: #{tpu_custom_call.1} parent=47 // pred_region
          %s626 = smul.u32 2, %s29
          %s628 = ssub.s32 512, 512
          %629 = vsyncadd %s619, %s628
          %s630 = smul.addr %s28, 8
          %s631 = sadd.s32 %s626, %s630
          %s632 = smul.addr %s631, 128
          %s633 = scalar_lea.hbm %s7, %s632
          %s634 = sshll.u32 %s622, 4
          %s635 = int_to_ptr.vmem [resolvable:$true] %s634
          %640 = dma.vmem_to_hbm [thread:$0]  %s635, 512, %s633, %s619, 256, 512, 16
        $region56: #{tpu_custom_call.1} parent=47 // pred_fallthru
          _
      $region48: #{tpu_custom_call.1} parent=5 // pred_fallthru
        _
      %p641 = scmp.le.s32.totalorder 2, %s19
      // Predicated region
      $region57: #{tpu_custom_call.1} parent=5 // pred_check
        %p642 = pneg %p641
      $region58: #{tpu_custom_call.1} parent=5 // pred_check_branch
        %644 = sbr.rel (%p642) target = $region60
      $region59: #{tpu_custom_call.1} parent=5 // pred_region
        %s645 = ssub.s32 %s19, 2
        // Predicated region
        $region61: #{tpu_custom_call.1} parent=59 // pred_check
          %p646 = pneg %p216
        $region62: #{tpu_custom_call.1} parent=59 // pred_check_branch
          %648 = sbr.rel (%p646) target = $region64
        $region63: #{tpu_custom_call.1} parent=59 // pred_region
          %s649 = sand.u32 %s201, 1
          %s650 = scalar_lea.sflag [#allocation4], %s649
          %s651 = sand.u32 %s201, 1
          %s652 = smul.addr %s651, 32
          %s653 = scalar_lea.vmem [#allocation5], %s652
          %654 = dma.done %s650, 512
        $region64: #{tpu_custom_call.1} parent=59 // pred_fallthru
          _
      $region60: #{tpu_custom_call.1} parent=5 // pred_fallthru
        _
    $region6: #{tpu_custom_call.1} parent=1 // loop_footer
      %s23 = sadd.s32 1, %s19
    $region7: #{tpu_custom_call.1} parent=1 // loop_footer_branch
      %18 = sbr.rel target = $region3
    $region8: #{tpu_custom_call.1} parent=1 // loop_exit
      _
    %655 = vsyncpa [#allocation3], 1
    %s656 = scalar_lea.sflag [#allocation3], 1
    %657 = vsyncpa %s656, 1
    %658 = vsyncpa [#allocation4], 1
    %s659 = scalar_lea.sflag [#allocation4], 1
    %660 = vsyncpa %s659, 1

</llo_original>
